<compile_context>
chip_gen: v7x
topology: tpu7x:2x2x1
jax: 0.10.0
libtpu: 0.0.40
codegen_flags: <defaults>
</compile_context>

<pallas_src>
import functools

import jax
import jax.numpy as jnp
from jax.experimental import pallas as pl
from jax.experimental.pallas import tpu as pltpu

HIDDEN1 = 256
HIDDEN2 = 64
LANE = 128


def _round_up(x, m):
    return (x + m - 1) // m * m


def _cdiv(a, b):
    return -(-a // b)


def _param_generate_kernel(x_ref, w1_ref, b1_ref, w2_ref, b2_ref,
                           w3_ref, b3_ref, o_ref, *, out_cols):
    # fc1 + relu   (bf16 operands, f32 MXU accumulation)
    x = x_ref[...].astype(jnp.bfloat16)
    h1 = jnp.dot(x, w1_ref[...], preferred_element_type=jnp.float32)
    h1 = jnp.maximum(h1 + b1_ref[...], 0.0)
    # fc2 + relu
    h2 = jnp.dot(h1.astype(jnp.bfloat16), w2_ref[...],
                 preferred_element_type=jnp.float32)
    h2 = jnp.maximum(h2 + b2_ref[...], 0.0)
    # mix (lane-padded to 128 logits; padded bias = -1e30 so padded lanes
    # contribute exp(-huge) == 0 and the real-lane softmax is unchanged)
    logits = jnp.dot(h2.astype(jnp.bfloat16), w3_ref[...],
                     preferred_element_type=jnp.float32) + b3_ref[...]
    m = jnp.max(logits, axis=-1, keepdims=True)
    e = jnp.exp(logits - m)
    denom = jnp.sum(e, axis=-1, keepdims=True)
    probs = e * pl.reciprocal(denom, approx=False)
    # Write only the real output columns (narrow store) -- no wrapper slice.
    # When out_cols == 128 (lane_dense_out) this slice is a no-op.
    o_ref[...] = probs[:, :out_cols]


def param_generate_forward(states, now_param, params, out_dim, *,
                           block_m=2048, lane_dense_out=False):
    """states: [B, input_dim] f32; now_param unused (matches torch forward)."""
    del now_param  # unused in the reference forward
    w1, b1, w2, b2, w3p, b3p = params
    B, in_dim = states.shape
    out_pad = w3p.shape[1]  # lane-padded mix width (multiple of 128)
    out_cols = out_pad if lane_dense_out else out_dim

    # --- batch-tile selection -------------------------------------------
    # Amortize ~0.35us per-step overhead with a big tile, minimize ragged
    # padding, and at large B keep >= 2 steps so both v7x TensorCores work.
    steps = _cdiv(B, block_m)
    if B >= 1024:
        steps = max(steps, 2)
    bm = max(8, min(_round_up(_cdiv(B, steps), 8), _round_up(block_m, 8)))
    grid = (_cdiv(B, bm),)   # ragged last tile handled by Pallas (no jnp.pad)

    const = lambda i: (0, 0)  # weights/biases: VMEM-resident, never re-fetched

    # --- VMEM budget / cost hint ----------------------------------------
    w_bytes = (w1.size * 2 + w2.size * 2 + w3p.size * 2
               + (b1.size + b2.size + b3p.size) * 4)
    live_bytes = (2 * w_bytes                                  # resident params
                  + bm * (2 * in_dim * 4                        # states dbl buf
                          + 2 * out_cols * 4                    # output dbl buf
                          + (HIDDEN1 + HIDDEN2 + 2 * LANE) * 4))  # f32 temps
    vmem_limit = int(min(max(2 * live_bytes, 32 * 1024 * 1024),
                         48 * 1024 * 1024))

    flops = 2 * B * (in_dim * HIDDEN1 + HIDDEN1 * HIDDEN2 + HIDDEN2 * out_pad)
    bytes_accessed = (B * (in_dim + out_cols) * 4 + w_bytes)

    kernel = functools.partial(_param_generate_kernel, out_cols=out_cols)

    out = pl.pallas_call(
        kernel,
        out_shape=jax.ShapeDtypeStruct((B, out_cols), jnp.float32),
        grid=grid,
        in_specs=[
            pl.BlockSpec((bm, in_dim), lambda i: (i, 0)),   # states tile
            pl.BlockSpec((in_dim, HIDDEN1), const),         # w1 (bf16)
            pl.BlockSpec((1, HIDDEN1), const),              # b1 (f32)
            pl.BlockSpec((HIDDEN1, HIDDEN2), const),        # w2 (bf16)
            pl.BlockSpec((1, HIDDEN2), const),              # b2 (f32)
            pl.BlockSpec((HIDDEN2, out_pad), const),        # w3 padded (bf16)
            pl.BlockSpec((1, out_pad), const),              # b3 padded (f32)
        ],
        out_specs=pl.BlockSpec((bm, out_cols), lambda i: (i, 0)),
        compiler_params=pltpu.CompilerParams(
            dimension_semantics=("parallel",),
            vmem_limit_bytes=vmem_limit),
        cost_estimate=pl.CostEstimate(
            flops=flops,
            transcendentals=B * out_pad,
            bytes_accessed=bytes_accessed),
    )(states, w1, b1, w2, b2, w3p, b3p)

    if lane_dense_out:
        return out[:, :out_dim]
    return out


def init_params(key, input_dim, action_dim):
    """Deterministic synthetic parameters (shapes match the torch module)."""
    k1, k2, k3, k4, k5, k6 = jax.random.split(key, 6)
    out_dim = action_dim * 3
    out_pad = _round_up(max(out_dim, LANE), LANE)
    # stored as [in, out] (transposed vs torch's [out, in]); weights bf16
    w1 = (jax.random.normal(k1, (input_dim, HIDDEN1), jnp.float32) * 0.05
          ).astype(jnp.bfloat16)
    b1 = jax.random.normal(k2, (1, HIDDEN1), jnp.float32) * 0.05
    w2 = (jax.random.normal(k3, (HIDDEN1, HIDDEN2), jnp.float32) * 0.05
          ).astype(jnp.bfloat16)
    b2 = jax.random.normal(k4, (1, HIDDEN2), jnp.float32) * 0.05
    w3 = jax.random.normal(k5, (HIDDEN2, out_dim), jnp.float32) * 0.05
    b3 = jax.random.normal(k6, (1, out_dim), jnp.float32) * 0.05
    # Lane-pad the mix layer to a 128-wide logit block; padded bias = -1e30 so
    # the padded lanes contribute exactly 0 to the softmax denominator.
    w3p = jnp.zeros((HIDDEN2, out_pad), jnp.float32
                    ).at[:, :out_dim].set(w3).astype(jnp.bfloat16)
    b3p = jnp.full((1, out_pad), -1e30, jnp.float32).at[:, :out_dim].set(b3)
    # log_stds (1, action_dim) exists in the module but is unused in forward.
    return (w1, b1, w2, b2, w3p, b3p), out_dim


def reference_forward(states, params, out_dim):
    """Pure-JAX reference with the same dtype strategy as the kernel."""
    w1, b1, w2, b2, w3p, b3p = params
    x = states.astype(jnp.bfloat16)
    h1 = jnp.maximum(
        jnp.dot(x, w1, preferred_element_type=jnp.float32) + b1, 0.0)
    h2 = jnp.maximum(
        jnp.dot(h1.astype(jnp.bfloat16), w2,
                preferred_element_type=jnp.float32) + b2, 0.0)
    logits = jnp.dot(h2.astype(jnp.bfloat16), w3p,
                     preferred_element_type=jnp.float32) + b3p
    probs = jax.nn.softmax(logits, axis=-1)
    return probs[:, :out_dim]


if __name__ == "__main__":
    key = jax.random.PRNGKey(0)
    k_params, k_states, k_now = jax.random.split(key, 3)

    batch = 8
    input_dim = 32      # state_shape = (32,)
    action_dim = 4      # action_shape = (4,)  -> real output dim = 12

    params, out_dim = init_params(k_params, input_dim, action_dim)
    states = jax.random.normal(k_states, (batch, input_dim), jnp.float32)
    now_param = jax.random.normal(k_now, (batch, action_dim), jnp.float32)

    out = param_generate_forward(states, now_param, params, out_dim)
    out = jax.block_until_ready(out)

    ref = reference_forward(states, params, out_dim)
    assert out.shape == (batch, out_dim)
    assert jnp.allclose(jnp.sum(out, axis=-1), 1.0, atol=1e-4)
    assert jnp.allclose(out, ref, atol=1e-4, rtol=1e-4)

    print("KERNEL_OK")
</pallas_src>

<mosaic_0001>
module attributes {stable_mosaic.version = 11 : i64} {
  func.func @_param_generate_kernel(%arg0: i32, %arg1: memref<8x32xf32, #tpu.memory_space<vmem>>, %arg2: memref<32x256xbf16, #tpu.memory_space<vmem>>, %arg3: memref<1x256xf32, #tpu.memory_space<vmem>>, %arg4: memref<256x64xbf16, #tpu.memory_space<vmem>>, %arg5: memref<1x64xf32, #tpu.memory_space<vmem>>, %arg6: memref<64x128xbf16, #tpu.memory_space<vmem>>, %arg7: memref<1x128xf32, #tpu.memory_space<vmem>>, %arg8: memref<8x12xf32, #tpu.memory_space<vmem>>) attributes {dimension_semantics = [#tpu.dimension_semantics<parallel>], iteration_bounds = array<i64: 1>, scalar_prefetch = 0 : i64, scratch_operands = 0 : i64, tpu.core_type = #tpu.core_type<tc>, window_params = [{transform_indices = @transform_0, window_bounds = array<i64: 8, 32>}, {pipeline_mode = #tpu.pipeline_mode<synchronous>, transform_indices = @transform_1, window_bounds = array<i64: 32, 256>}, {pipeline_mode = #tpu.pipeline_mode<synchronous>, transform_indices = @transform_2, window_bounds = array<i64: 1, 256>}, {pipeline_mode = #tpu.pipeline_mode<synchronous>, transform_indices = @transform_3, window_bounds = array<i64: 256, 64>}, {pipeline_mode = #tpu.pipeline_mode<synchronous>, transform_indices = @transform_4, window_bounds = array<i64: 1, 64>}, {pipeline_mode = #tpu.pipeline_mode<synchronous>, transform_indices = @transform_5, window_bounds = array<i64: 64, 128>}, {pipeline_mode = #tpu.pipeline_mode<synchronous>, transform_indices = @transform_6, window_bounds = array<i64: 1, 128>}, {transform_indices = @transform_7, window_bounds = array<i64: 8, 12>}]} {
    %c0 = arith.constant 0 : index
    %c0_0 = arith.constant 0 : index
    %0 = vector.load %arg1[%c0, %c0_0] : memref<8x32xf32, #tpu.memory_space<vmem>>, vector<8x32xf32>
    %1 = arith.truncf %0 : vector<8x32xf32> to vector<8x32xbf16>
    %c0_1 = arith.constant 0 : index
    %c0_2 = arith.constant 0 : index
    %2 = vector.load %arg2[%c0_1, %c0_2] : memref<32x256xbf16, #tpu.memory_space<vmem>>, vector<32x256xbf16>
    %cst = arith.constant dense<0.000000e+00> : vector<8x256xf32>
    %3 = tpu.matmul %1, %2, %cst {dimension_numbers = #tpu.dot_dimension_numbers<[1], [0], [0], [1], [0, 0, 1, 1], [], []>} : vector<8x32xbf16>, vector<32x256xbf16>, vector<8x256xf32> -> vector<8x256xf32>
    %c0_3 = arith.constant 0 : index
    %c0_4 = arith.constant 0 : index
    %4 = vector.load %arg3[%c0_3, %c0_4] : memref<1x256xf32, #tpu.memory_space<vmem>>, vector<1x256xf32>
    %5 = vector.broadcast %4 : vector<1x256xf32> to vector<8x256xf32>
    %6 = arith.addf %3, %5 : vector<8x256xf32>
    %cst_5 = arith.constant 0.000000e+00 : f32
    %7 = vector.broadcast %cst_5 : f32 to vector<8x256xf32>
    %8 = arith.maximumf %6, %7 : vector<8x256xf32>
    %9 = arith.truncf %8 : vector<8x256xf32> to vector<8x256xbf16>
    %c0_6 = arith.constant 0 : index
    %c0_7 = arith.constant 0 : index
    %10 = vector.load %arg4[%c0_6, %c0_7] : memref<256x64xbf16, #tpu.memory_space<vmem>>, vector<256x64xbf16>
    %cst_8 = arith.constant dense<0.000000e+00> : vector<8x64xf32>
    %11 = tpu.matmul %9, %10, %cst_8 {dimension_numbers = #tpu.dot_dimension_numbers<[1], [0], [0], [1], [0, 0, 1, 1], [], []>} : vector<8x256xbf16>, vector<256x64xbf16>, vector<8x64xf32> -> vector<8x64xf32>
    %c0_9 = arith.constant 0 : index
    %c0_10 = arith.constant 0 : index
    %12 = vector.load %arg5[%c0_9, %c0_10] : memref<1x64xf32, #tpu.memory_space<vmem>>, vector<1x64xf32>
    %13 = vector.broadcast %12 : vector<1x64xf32> to vector<8x64xf32>
    %14 = arith.addf %11, %13 : vector<8x64xf32>
    %cst_11 = arith.constant 0.000000e+00 : f32
    %15 = vector.broadcast %cst_11 : f32 to vector<8x64xf32>
    %16 = arith.maximumf %14, %15 : vector<8x64xf32>
    %17 = arith.truncf %16 : vector<8x64xf32> to vector<8x64xbf16>
    %c0_12 = arith.constant 0 : index
    %c0_13 = arith.constant 0 : index
    %18 = vector.load %arg6[%c0_12, %c0_13] : memref<64x128xbf16, #tpu.memory_space<vmem>>, vector<64x128xbf16>
    %cst_14 = arith.constant dense<0.000000e+00> : vector<8x128xf32>
    %19 = tpu.matmul %17, %18, %cst_14 {dimension_numbers = #tpu.dot_dimension_numbers<[1], [0], [0], [1], [0, 0, 1, 1], [], []>} : vector<8x64xbf16>, vector<64x128xbf16>, vector<8x128xf32> -> vector<8x128xf32>
    %c0_15 = arith.constant 0 : index
    %c0_16 = arith.constant 0 : index
    %20 = vector.load %arg7[%c0_15, %c0_16] : memref<1x128xf32, #tpu.memory_space<vmem>>, vector<1x128xf32>
    %21 = vector.broadcast %20 : vector<1x128xf32> to vector<8x128xf32>
    %22 = arith.addf %19, %21 : vector<8x128xf32>
    %cst_17 = arith.constant dense<0xFF800000> : vector<8xf32>
    %23 = vector.multi_reduction <maximumf>, %22, %cst_17 [1] : vector<8x128xf32> to vector<8xf32>
    %24 = vector.shape_cast %23 : vector<8xf32> to vector<8x1xf32>
    %25 = vector.broadcast %24 : vector<8x1xf32> to vector<8x128xf32>
    %26 = arith.subf %22, %25 : vector<8x128xf32>
    %27 = math.exp %26 : vector<8x128xf32>
    %cst_18 = arith.constant dense<0.000000e+00> : vector<8xf32>
    %28 = vector.multi_reduction <add>, %27, %cst_18 [1] : vector<8x128xf32> to vector<8xf32>
    %29 = vector.shape_cast %28 : vector<8xf32> to vector<8x1xf32>
    %30 = tpu.reciprocal %29 : vector<8x1xf32> -> vector<8x1xf32>
    %31 = vector.broadcast %30 : vector<8x1xf32> to vector<8x128xf32>
    %32 = arith.mulf %27, %31 : vector<8x128xf32>
    %33 = vector.extract_strided_slice %32 {offsets = [0, 0], sizes = [8, 12], strides = [1, 1]} : vector<8x128xf32> to vector<8x12xf32>
    %c0_19 = arith.constant 0 : index
    %c0_20 = arith.constant 0 : index
    %34 = vector.load %arg8[%c0_19, %c0_20] : memref<8x12xf32, #tpu.memory_space<vmem>>, vector<8x12xf32>
    tpu.vector_store %arg8[%c0_19, %c0_20], %33 {strides = array<i32>} : memref<8x12xf32, #tpu.memory_space<vmem>>, vector<8x12xf32>,
    return
  }
  func.func @transform_0(%arg0: i32) -> (i32, i32) {
    %c0_i32 = arith.constant 0 : i32
    %c0_i32_0 = arith.constant 0 : i32
    return %arg0, %c0_i32 : i32, i32
  }
  func.func @transform_1(%arg0: i32) -> (i32, i32) {
    %c0_i32 = arith.constant 0 : i32
    %c0_i32_0 = arith.constant 0 : i32
    %c0_i32_1 = arith.constant 0 : i32
    return %c0_i32, %c0_i32_0 : i32, i32
  }
  func.func @transform_2(%arg0: i32) -> (i32, i32) {
    %c0_i32 = arith.constant 0 : i32
    %c0_i32_0 = arith.constant 0 : i32
    %c0_i32_1 = arith.constant 0 : i32
    return %c0_i32, %c0_i32_0 : i32, i32
  }
  func.func @transform_3(%arg0: i32) -> (i32, i32) {
    %c0_i32 = arith.constant 0 : i32
    %c0_i32_0 = arith.constant 0 : i32
    %c0_i32_1 = arith.constant 0 : i32
    return %c0_i32, %c0_i32_0 : i32, i32
  }
  func.func @transform_4(%arg0: i32) -> (i32, i32) {
    %c0_i32 = arith.constant 0 : i32
    %c0_i32_0 = arith.constant 0 : i32
    %c0_i32_1 = arith.constant 0 : i32
    return %c0_i32, %c0_i32_0 : i32, i32
  }
  func.func @transform_5(%arg0: i32) -> (i32, i32) {
    %c0_i32 = arith.constant 0 : i32
    %c0_i32_0 = arith.constant 0 : i32
    %c0_i32_1 = arith.constant 0 : i32
    return %c0_i32, %c0_i32_0 : i32, i32
  }
  func.func @transform_6(%arg0: i32) -> (i32, i32) {
    %c0_i32 = arith.constant 0 : i32
    %c0_i32_0 = arith.constant 0 : i32
    %c0_i32_1 = arith.constant 0 : i32
    return %c0_i32, %c0_i32_0 : i32, i32
  }
  func.func @transform_7(%arg0: i32) -> (i32, i32) {
    %c0_i32 = arith.constant 0 : i32
    %c0_i32_0 = arith.constant 0 : i32
    return %arg0, %c0_i32 : i32, i32
  }
}

</mosaic_0001>

<llo_original>
// kernel: tpu_custom_call.1
$region0: #{tpu_custom_call.1}
  #allocation0 [shape = 'u32[]', space=smem, size = 0x4, offset = 0x4, fixed_abs, tag = 'smem constant byte address 0x4 - core index']
  #allocation1 [shape = 'u32[144,128]{1,0:T(1,128)}', space=vmem, size = 0x12000, scoped, tag = 'internal scratch']
  %s0 = inlined_call_operand.vmem [shape: f32[8,32], index: 0, kind: input, shape index: {}]
  %s1 = inlined_call_operand.vmem [shape: bf16[32,256], index: 1, kind: input, shape index: {}]
  %s2 = inlined_call_operand.vmem [shape: f32[1,256], index: 2, kind: input, shape index: {}]
  %s3 = inlined_call_operand.vmem [shape: bf16[256,64], index: 3, kind: input, shape index: {}]
  %s4 = inlined_call_operand.vmem [shape: f32[1,64], index: 4, kind: input, shape index: {}]
  %s5 = inlined_call_operand.vmem [shape: bf16[64,128], index: 5, kind: input, shape index: {}]
  %s6 = inlined_call_operand.vmem [shape: f32[1,128], index: 6, kind: input, shape index: {}]
  %s7 = inlined_call_operand.hbm [shape: f32[8,12], index: 7, kind: output, shape index: {}]
  %s8 = sld [smem:[#allocation0]]
  $region38: #{tpu_custom_call.1} parent=0
    _
  %s10 = ssub.s32 1, %s8
  %s11 = scalar_select 0, %s10, %s8
  $region1: #{tpu_custom_call.1} parent=0
    #allocation2 [shape = 'u8[4096]{0}', space=vmem, size = 0x1000, scoped, tag = 'output window, operand 0, single buffered']
    #allocation3 [shape = 's32[1]{0}', space=sflag, size = 0x4, scoped, tag = 'scoped memory for tpu_custom_call.1']
    %12 = vsyncpa [#allocation3], 0
    // Predicated region
    $region2: #{tpu_custom_call.1} parent=1 // pred_check
      _
    $region3: #{tpu_custom_call.1} parent=1 // pred_check_branch
      %14 = sbr.rel (0) target = $region5
    $region4: #{tpu_custom_call.1} parent=1 // pred_region
      _
    $region5: #{tpu_custom_call.1} parent=1 // pred_fallthru
      _
    // Predicated region
    $region6: #{tpu_custom_call.1} parent=1 // pred_check
      _
    $region7: #{tpu_custom_call.1} parent=1 // pred_check_branch
      %16 = sbr.rel (0) target = $region9
    $region8: #{tpu_custom_call.1} parent=1 // pred_region
      _
    $region9: #{tpu_custom_call.1} parent=1 // pred_fallthru
      _
    // Predicated region
    $region10: #{tpu_custom_call.1} parent=1 // pred_check
      _
    $region11: #{tpu_custom_call.1} parent=1 // pred_check_branch
      %18 = sbr.rel (0) target = $region13
    $region12: #{tpu_custom_call.1} parent=1 // pred_region
      _
    $region13: #{tpu_custom_call.1} parent=1 // pred_fallthru
      _
    // Predicated region
    $region14: #{tpu_custom_call.1} parent=1 // pred_check
      _
    $region15: #{tpu_custom_call.1} parent=1 // pred_check_branch
      %20 = sbr.rel (0) target = $region17
    $region16: #{tpu_custom_call.1} parent=1 // pred_region
      _
    $region17: #{tpu_custom_call.1} parent=1 // pred_fallthru
      _
    // Predicated region
    $region18: #{tpu_custom_call.1} parent=1 // pred_check
      _
    $region19: #{tpu_custom_call.1} parent=1 // pred_check_branch
      %22 = sbr.rel (0) target = $region21
    $region20: #{tpu_custom_call.1} parent=1 // pred_region
      _
    $region21: #{tpu_custom_call.1} parent=1 // pred_fallthru
      _
    // Predicated region
    $region22: #{tpu_custom_call.1} parent=1 // pred_check
      _
    $region23: #{tpu_custom_call.1} parent=1 // pred_check_branch
      %24 = sbr.rel (0) target = $region25
    $region24: #{tpu_custom_call.1} parent=1 // pred_region
      _
    $region25: #{tpu_custom_call.1} parent=1 // pred_fallthru
      _
    // Predicated region
    $region26: #{tpu_custom_call.1} parent=1 // pred_check
      _
    $region27: #{tpu_custom_call.1} parent=1 // pred_check_branch
      %26 = sbr.rel (0) target = $region29
    $region28: #{tpu_custom_call.1} parent=1 // pred_region
      _
    $region29: #{tpu_custom_call.1} parent=1 // pred_fallthru
      _
    %v28 = vld [vmem:[%s0] sm:$0xff]
    %v29 = vpack.c.bf16 %v28, %v28
    %v30 = vld [vmem:[%s1] sm:$0xff]
    %v31 = vld [vmem:[%s1 + $0x8] sm:$0xff]
    %v32 = vld [vmem:[%s1 + $0x10] sm:$0xff]
    %v33 = vld [vmem:[%s1 + $0x18] sm:$0xff]
    %v34 = vld [vmem:[%s2] sm:$0x3]
    %v36 = vlaneseq
    %v37 = vshrl.u32 %v36, 7
    %v38 = vsub.s32 0, %v37
    %v39 = vrot.slane %v34, %v38
    %v40 = vlaneseq
    %v41 = vshrl.u32 %v40, 7
    %v42 = vsub.s32 1, %v41
    %v43 = vrot.slane %v34, %v42
    %v50 = vunpack.c.l.b16 %v30
    %v51 = vunpack.c.h.b16 %v30
    %v52 = vunpack.c.l.b16 %v31
    %v53 = vunpack.c.h.b16 %v31
    %v54 = vunpack.c.l.b16 %v32
    %v55 = vunpack.c.h.b16 %v32
    %v56 = vunpack.c.l.b16 %v33
    %v57 = vunpack.c.h.b16 %v33
    %v58 = vpack.c.b16 %v52, %v50
    %v59 = vpack.c.b16 %v53, %v51
    %v60 = vpack.c.b16 %v56, %v54
    %v61 = vpack.c.b16 %v57, %v55
    %vm66 = vcmask 261120
    %v68 = vsel %vm66, %v29, 0
    %70 = vmatprep.subr.bf16.mxu0 %v59
    %71 = vmatpush1.bf16.msra.mxu0 %v58
    %72 = vmatprep.subr.bf16.mxu0 %v61
    %73 = vmatpush1.bf16.msra.mxu0 %v60
    %74 = vmatprep.subr.bf16.mxu0 0
    %75 = vmatpush1.bf16.msra.mxu0 0
    %76 = vmatprep.subr.bf16.mxu0 0
    %77 = vmatpush1.bf16.msra.mxu0 0
    %78 = vmatprep.subr.bf16.mxu0 0
    %79 = vmatpush1.bf16.msra.mxu0 0
    %80 = vmatprep.subr.bf16.mxu0 0
    %81 = vmatpush1.bf16.msra.mxu0 0
    %82 = vmatprep.subr.bf16.mxu0 0
    %83 = vmatpush1.bf16.msra.mxu0 0
    %84 = vmatprep.subr.bf16.mxu0 0
    %85 = vmatpush1.bf16.msra.mxu0 0
    %86 = vmatprep.subr.bf16.mxu0 0
    %87 = vmatpush1.bf16.msra.mxu0 0
    %88 = vmatprep.subr.bf16.mxu0 0
    %89 = vmatpush1.bf16.msra.mxu0 0
    %90 = vmatprep.subr.bf16.mxu0 0
    %91 = vmatpush1.bf16.msra.mxu0 0
    %92 = vmatprep.subr.bf16.mxu0 0
    %93 = vmatpush1.bf16.msra.mxu0 0
    %94 = vmatprep.subr.bf16.mxu0 0
    %95 = vmatpush1.bf16.msra.mxu0 0
    %96 = vmatprep.subr.bf16.mxu0 0
    %97 = vmatpush1.bf16.msra.mxu0 0
    %98 = vmatprep.subr.bf16.mxu0 0
    %99 = vmatpush1.bf16.msra.mxu0 0
    %100 = vmatprep.subr.bf16.mxu0 0
    %101 = vmatpush1.bf16.msra.mxu0 0
    %102 = vmatprep.mubr.bf16.mxu0 0
    %103 = vmatmul.mubr.bf16.gmra.mrb[0].mxu0 %v68
    %v104 = vpop.f32.mrb[0].mxu0
    %v105 = vadd.f32 %v39, %v104
    %v106 = vpop.f32.mrb[0].mxu0
    %v107 = vadd.f32 %v43, %v106
    %v108 = vpop.f32.mrb[0].mxu0
    %v109 = vpop.f32.mrb[0].mxu0
    %110 = vdwg.mxu0
    %v111 = vmax.f32 %v105, 0.0
    %v112 = vmax.f32 %v107, 0.0
    %v113 = vpack.c.bf16 %v111, %v111
    %v114 = vpack.c.bf16 %v112, %v112
    %v115 = vld [vmem:[%s3] sm:$0xf]
    %v116 = vld [vmem:[%s3 + $0x4] sm:$0xf]
    %v117 = vld [vmem:[%s3 + $0x8] sm:$0xf]
    %v118 = vld [vmem:[%s3 + $0xc] sm:$0xf]
    %v119 = vld [vmem:[%s3 + $0x10] sm:$0xf]
    %v120 = vld [vmem:[%s3 + $0x14] sm:$0xf]
    %v121 = vld [vmem:[%s3 + $0x18] sm:$0xf]
    %v122 = vld [vmem:[%s3 + $0x1c] sm:$0xf]
    %v123 = vld [vmem:[%s3 + $0x20] sm:$0xf]
    %v124 = vld [vmem:[%s3 + $0x24] sm:$0xf]
    %v125 = vld [vmem:[%s3 + $0x28] sm:$0xf]
    %v126 = vld [vmem:[%s3 + $0x2c] sm:$0xf]
    %v127 = vld [vmem:[%s3 + $0x30] sm:$0xf]
    %v128 = vld [vmem:[%s3 + $0x34] sm:$0xf]
    %v129 = vld [vmem:[%s3 + $0x38] sm:$0xf]
    %v130 = vld [vmem:[%s3 + $0x3c] sm:$0xf]
    %v131 = vld [vmem:[%s3 + $0x40] sm:$0xf]
    %v132 = vld [vmem:[%s3 + $0x44] sm:$0xf]
    %v133 = vld [vmem:[%s3 + $0x48] sm:$0xf]
    %v134 = vld [vmem:[%s3 + $0x4c] sm:$0xf]
    %v135 = vld [vmem:[%s3 + $0x50] sm:$0xf]
    %v136 = vld [vmem:[%s3 + $0x54] sm:$0xf]
    %v137 = vld [vmem:[%s3 + $0x58] sm:$0xf]
    %v138 = vld [vmem:[%s3 + $0x5c] sm:$0xf]
    %v139 = vld [vmem:[%s3 + $0x60] sm:$0xf]
    %v140 = vld [vmem:[%s3 + $0x64] sm:$0xf]
    %v141 = vld [vmem:[%s3 + $0x68] sm:$0xf]
    %v142 = vld [vmem:[%s3 + $0x6c] sm:$0xf]
    %v143 = vld [vmem:[%s3 + $0x70] sm:$0xf]
    %v144 = vld [vmem:[%s3 + $0x74] sm:$0xf]
    %v145 = vld [vmem:[%s3 + $0x78] sm:$0xf]
    %v146 = vld [vmem:[%s3 + $0x7c] sm:$0xf]
    %v147 = vld [vmem:[%s4] sm:$0x1]
    %v149 = vlaneseq
    %v150 = vshrl.u32 %v149, 7
    %v151 = vsub.s32 0, %v150
    %v152 = vrot.slane %v147, %v151
    %v186 = vunpack.c.l.b16 %v115
    %v187 = vunpack.c.l.b16 %v116
    %v188 = vunpack.c.l.b16 %v117
    %v189 = vunpack.c.l.b16 %v118
    %v190 = vunpack.c.l.b16 %v119
    %v191 = vunpack.c.l.b16 %v120
    %v192 = vunpack.c.l.b16 %v121
    %v193 = vunpack.c.l.b16 %v122
    %v194 = vunpack.c.l.b16 %v123
    %v195 = vunpack.c.l.b16 %v124
    %v196 = vunpack.c.l.b16 %v125
    %v197 = vunpack.c.l.b16 %v126
    %v198 = vunpack.c.l.b16 %v127
    %v199 = vunpack.c.l.b16 %v128
    %v200 = vunpack.c.l.b16 %v129
    %v201 = vunpack.c.l.b16 %v130
    %v202 = vunpack.c.l.b16 %v131
    %v203 = vunpack.c.l.b16 %v132
    %v204 = vunpack.c.l.b16 %v133
    %v205 = vunpack.c.l.b16 %v134
    %v206 = vunpack.c.l.b16 %v135
    %v207 = vunpack.c.l.b16 %v136
    %v208 = vunpack.c.l.b16 %v137
    %v209 = vunpack.c.l.b16 %v138
    %v210 = vunpack.c.l.b16 %v139
    %v211 = vunpack.c.l.b16 %v140
    %v212 = vunpack.c.l.b16 %v141
    %v213 = vunpack.c.l.b16 %v142
    %v214 = vunpack.c.l.b16 %v143
    %v215 = vunpack.c.l.b16 %v144
    %v216 = vunpack.c.l.b16 %v145
    %v217 = vunpack.c.l.b16 %v146
    %v218 = vpack.c.b16 %v187, %v186
    %v219 = vpack.c.b16 %v189, %v188
    %v220 = vpack.c.b16 %v191, %v190
    %v221 = vpack.c.b16 %v193, %v192
    %v222 = vpack.c.b16 %v195, %v194
    %v223 = vpack.c.b16 %v197, %v196
    %v224 = vpack.c.b16 %v199, %v198
    %v225 = vpack.c.b16 %v201, %v200
    %v226 = vpack.c.b16 %v203, %v202
    %v227 = vpack.c.b16 %v205, %v204
    %v228 = vpack.c.b16 %v207, %v206
    %v229 = vpack.c.b16 %v209, %v208
    %v230 = vpack.c.b16 %v211, %v210
    %v231 = vpack.c.b16 %v213, %v212
    %v232 = vpack.c.b16 %v215, %v214
    %v233 = vpack.c.b16 %v217, %v216
    %250 = vmatprep.subr.bf16.mxu0 0
    %251 = vmatpush1.bf16.msra.mxu0 %v218
    %252 = vmatprep.subr.bf16.mxu0 0
    %253 = vmatpush1.bf16.msra.mxu0 %v219
    %254 = vmatprep.subr.bf16.mxu0 0
    %255 = vmatpush1.bf16.msra.mxu0 %v220
    %256 = vmatprep.subr.bf16.mxu0 0
    %257 = vmatpush1.bf16.msra.mxu0 %v221
    %258 = vmatprep.subr.bf16.mxu0 0
    %259 = vmatpush1.bf16.msra.mxu0 %v222
    %260 = vmatprep.subr.bf16.mxu0 0
    %261 = vmatpush1.bf16.msra.mxu0 %v223
    %262 = vmatprep.subr.bf16.mxu0 0
    %263 = vmatpush1.bf16.msra.mxu0 %v224
    %264 = vmatprep.subr.bf16.mxu0 0
    %265 = vmatpush1.bf16.msra.mxu0 %v225
    %266 = vmatprep.subr.bf16.mxu0 0
    %267 = vmatpush1.bf16.msra.mxu0 %v226
    %268 = vmatprep.subr.bf16.mxu0 0
    %269 = vmatpush1.bf16.msra.mxu0 %v227
    %270 = vmatprep.subr.bf16.mxu0 0
    %271 = vmatpush1.bf16.msra.mxu0 %v228
    %272 = vmatprep.subr.bf16.mxu0 0
    %273 = vmatpush1.bf16.msra.mxu0 %v229
    %274 = vmatprep.subr.bf16.mxu0 0
    %275 = vmatpush1.bf16.msra.mxu0 %v230
    %276 = vmatprep.subr.bf16.mxu0 0
    %277 = vmatpush1.bf16.msra.mxu0 %v231
    %278 = vmatprep.subr.bf16.mxu0 0
    %279 = vmatpush1.bf16.msra.mxu0 %v232
    %280 = vmatprep.subr.bf16.mxu0 0
    %281 = vmatpush1.bf16.msra.mxu0 %v233
    %282 = vmatprep.mubr.bf16.mxu0 %v114
    %283 = vmatmul.mubr.bf16.gmra.mrb[0].mxu0 %v113
    %v284 = vpop.f32.mrb[0].mxu0
    %v285 = vadd.f32 %v152, %v284
    %v286 = vpop.f32.mrb[0].mxu0
    %v287 = vpop.f32.mrb[0].mxu0
    %v288 = vpop.f32.mrb[0].mxu0
    %289 = vdwg.mxu0
    %v290 = vmax.f32 %v285, 0.0
    %v291 = vpack.c.bf16 %v290, %v290
    %v292 = vld [vmem:[%s5] sm:$0xf]
    %v293 = vld [vmem:[%s5 + $0x4] sm:$0xf]
    %v294 = vld [vmem:[%s5 + $0x8] sm:$0xf]
    %v295 = vld [vmem:[%s5 + $0xc] sm:$0xf]
    %v296 = vld [vmem:[%s5 + $0x10] sm:$0xf]
    %v297 = vld [vmem:[%s5 + $0x14] sm:$0xf]
    %v298 = vld [vmem:[%s5 + $0x18] sm:$0xf]
    %v299 = vld [vmem:[%s5 + $0x1c] sm:$0xf]
    %v300 = vld [vmem:[%s6] sm:$0x1]
    %v302 = vlaneseq
    %v303 = vshrl.u32 %v302, 7
    %v304 = vsub.s32 0, %v303
    %v305 = vrot.slane %v300, %v304
    %v315 = vunpack.c.l.b16 %v292
    %v316 = vunpack.c.l.b16 %v293
    %v317 = vunpack.c.l.b16 %v294
    %v318 = vunpack.c.l.b16 %v295
    %v319 = vunpack.c.l.b16 %v296
    %v320 = vunpack.c.l.b16 %v297
    %v321 = vunpack.c.l.b16 %v298
    %v322 = vunpack.c.l.b16 %v299
    %v323 = vpack.c.b16 %v316, %v315
    %v324 = vpack.c.b16 %v318, %v317
    %v325 = vpack.c.b16 %v320, %v319
    %v326 = vpack.c.b16 %v322, %v321
    %vm331 = vcmask 523264
    %v333 = vsel %vm331, %v291, 0
    %335 = vmatprep.subr.bf16.mxu0 0
    %336 = vmatpush1.bf16.msra.mxu0 %v323
    %337 = vmatprep.subr.bf16.mxu0 0
    %338 = vmatpush1.bf16.msra.mxu0 %v324
    %339 = vmatprep.subr.bf16.mxu0 0
    %340 = vmatpush1.bf16.msra.mxu0 %v325
    %341 = vmatprep.subr.bf16.mxu0 0
    %342 = vmatpush1.bf16.msra.mxu0 %v326
    %343 = vmatprep.subr.bf16.mxu0 0
    %344 = vmatpush1.bf16.msra.mxu0 0
    %345 = vmatprep.subr.bf16.mxu0 0
    %346 = vmatpush1.bf16.msra.mxu0 0
    %347 = vmatprep.subr.bf16.mxu0 0
    %348 = vmatpush1.bf16.msra.mxu0 0
    %349 = vmatprep.subr.bf16.mxu0 0
    %350 = vmatpush1.bf16.msra.mxu0 0
    %351 = vmatprep.subr.bf16.mxu0 0
    %352 = vmatpush1.bf16.msra.mxu0 0
    %353 = vmatprep.subr.bf16.mxu0 0
    %354 = vmatpush1.bf16.msra.mxu0 0
    %355 = vmatprep.subr.bf16.mxu0 0
    %356 = vmatpush1.bf16.msra.mxu0 0
    %357 = vmatprep.subr.bf16.mxu0 0
    %358 = vmatpush1.bf16.msra.mxu0 0
    %359 = vmatprep.subr.bf16.mxu0 0
    %360 = vmatpush1.bf16.msra.mxu0 0
    %361 = vmatprep.subr.bf16.mxu0 0
    %362 = vmatpush1.bf16.msra.mxu0 0
    %363 = vmatprep.subr.bf16.mxu0 0
    %364 = vmatpush1.bf16.msra.mxu0 0
    %365 = vmatprep.subr.bf16.mxu0 0
    %366 = vmatpush1.bf16.msra.mxu0 0
    %367 = vmatprep.mubr.bf16.mxu0 0
    %368 = vmatmul.mubr.bf16.gmra.mrb[0].mxu0 %v333
    %v369 = vpop.f32.mrb[0].mxu0
    %v370 = vadd.f32 %v305, %v369
    %v371 = vpop.f32.mrb[0].mxu0
    %v372 = vpop.f32.mrb[0].mxu0
    %v373 = vpop.f32.mrb[0].mxu0
    %374 = vdwg.mxu0
    %375 = vmax.xlane.f32.xlu0 %v370
    %v376 = vpop.xlane.xlu0 %375
    %v377 = vsub.f32 %v370, %v376
    %v378 = vmul.f32 %v377, 1.442695
    %v379 = vpow.pop %v378
    %380 = vadd.xlane.f32.xlu0 %v379
    %v381 = vpop.xlane.xlu0 %380
    %v382 = vrcp.pop %v381
    %v383 = vmul.f32 %v379, %v382
    %vm384 = vcmask 97280
    %385 = vst.msk [vmem:[#allocation2] sm:$0xff] %vm384, %v383
    // Predicated region
    $region30: #{tpu_custom_call.1} parent=1 // pred_check
      _
    $region31: #{tpu_custom_call.1} parent=1 // pred_check_branch
      %387 = sbr.rel (0) target = $region33
    $region32: #{tpu_custom_call.1} parent=1 // pred_region
      %s389 = ssub.s32 128, 128
      %390 = vsyncadd [#allocation3], %s389
      %s392 = sshll.u32 [#allocation2], 4
      %s393 = int_to_ptr.vmem [resolvable:$true] %s392
      %395 = dma.vmem_to_hbm [thread:$0]  %s393, 128, %s7, [#allocation3]
    $region33: #{tpu_custom_call.1} parent=1 // pred_fallthru
      _
    // Predicated region
    $region34: #{tpu_custom_call.1} parent=1 // pred_check
      _
    $region35: #{tpu_custom_call.1} parent=1 // pred_check_branch
      %397 = sbr.rel (0) target = $region37
    $region36: #{tpu_custom_call.1} parent=1 // pred_region
      %398 = dma.done [#allocation3], 128
    $region37: #{tpu_custom_call.1} parent=1 // pred_fallthru
      _
    %399 = vsyncpa [#allocation3], 1

</llo_original>
